<compile_context>
chip_gen: v7x
topology: tpu7x:2x2x1
jax: 0.10.0
libtpu: 0.0.40
codegen_flags: <defaults>
</compile_context>

<pallas_src>
import functools

import jax
import jax.numpy as jnp
import numpy as np
from jax.experimental import pallas as pl
from jax.experimental.pallas import tpu as pltpu

EPS = 1e-8


def _block_kernel(x_ref, w1_ref, wdw_ref, mask_ref, ph_ref, w3g_ref, pi_ref,
                  alpha_ref, o_ref, *, kernel_size, dilation, bb, t, use_roll):
    rows = bb * t
    x3 = x_ref[...]                                   # (bb, t, Cin) f32
    cin = x3.shape[-1]
    x2 = x3.reshape(rows, cin)

    mm_dtype = w1_ref.dtype
    a1 = alpha_ref[0]                                 # PReLU alphas from SMEM (scalars)
    a2 = alpha_ref[1]
    b1 = ph_ref[0:1, :]                               # (1, Chid)
    g1 = ph_ref[1:2, :]
    be1 = ph_ref[2:3, :]
    bdw = ph_ref[3:4, :]

    # ---- 1x1 conv (Cin -> Chid) on the MXU ----
    h = jnp.dot(x2.astype(mm_dtype), w1_ref[...],
                preferred_element_type=jnp.float32) + b1          # (rows, Chid) f32
    chid = h.shape[-1]

    # ---- PReLU ----
    h = jnp.where(h > 0, h, a1 * h)

    # ---- GroupNorm(1, Chid): per-sample single-pass stats, affine folded into one FMA ----
    inv_n = 1.0 / float(t * chid)
    h3 = h.reshape(bb, t, chid)
    s1 = jnp.sum(jnp.sum(h3, axis=2, keepdims=True), axis=1, keepdims=True)       # (bb,1,1)
    q1 = jnp.sum(jnp.sum(h3 * h3, axis=2, keepdims=True), axis=1, keepdims=True)  # (bb,1,1)
    mean1 = s1 * inv_n
    var1 = q1 * inv_n - mean1 * mean1
    inv1 = jax.lax.rsqrt(var1 + EPS)                              # (bb,1,1)
    scale1 = inv1 * g1.reshape(1, 1, chid)                        # (bb,1,Chid)
    shift1 = be1.reshape(1, 1, chid) - mean1 * scale1             # (bb,1,Chid)
    h = (h3 * scale1 + shift1).reshape(rows, chid)

    # ---- depthwise dilated conv along time (zero padded), via masked XLU rolls ----
    pad = dilation * (kernel_size - 1) // 2
    if not use_roll:
        # fallback for sublane-unaligned row counts (only taken when bb == 1)
        if pad > 0:
            zeros = jnp.zeros((pad, chid), h.dtype)
            hpad = jnp.concatenate([zeros, h, zeros], axis=0)
        else:
            hpad = h
    acc = None
    for j in range(kernel_size):
        shift = j * dilation - pad
        w_row = wdw_ref[j:j + 1, :]                               # (1, Chid)
        if use_roll:
            if shift == 0:
                contrib = w_row * h
            else:
                # rolled[r] = h[(r + shift) mod rows]; mask kills out-of-range /
                # cross-sample rows exactly (zero padding semantics).
                rolled = pltpu.roll(h, (-shift) % rows, 0)
                contrib = (w_row * rolled) * mask_ref[:, j:j + 1]
        else:
            contrib = w_row * hpad[j * dilation:j * dilation + t, :]
        acc = contrib if acc is None else acc + contrib
    h = acc + bdw

    # ---- PReLU ----
    h = jnp.where(h > 0, h, a2 * h)

    # ---- GroupNorm(1, Chid) stats; normalization + affine deferred through the 1x1 conv ----
    h3 = h.reshape(bb, t, chid)
    s2 = jnp.sum(jnp.sum(h3, axis=2, keepdims=True), axis=1, keepdims=True)
    q2 = jnp.sum(jnp.sum(h3 * h3, axis=2, keepdims=True), axis=1, keepdims=True)
    mean2 = s2 * inv_n
    var2 = q2 * inv_n - mean2 * mean2
    inv2 = jax.lax.rsqrt(var2 + EPS)                              # (bb,1,1)

    # ((h - m)*s*g2 + be2) @ w3 + b3  =  s*(h @ (g2*w3)) - m*s*colsum(g2*w3) + (be2@w3 + b3)
    y = jnp.dot(h.astype(mm_dtype), w3g_ref[...],
                preferred_element_type=jnp.float32)               # (rows, Cin)
    y3 = y.reshape(bb, t, cin)
    b3p = pi_ref[0:1, :].reshape(1, 1, cin)
    c3g = pi_ref[1:2, :].reshape(1, 1, cin)
    bias = b3p - (mean2 * inv2) * c3g                             # (bb,1,Cin)
    o_ref[...] = x3 + y3 * inv2 + bias                            # residual


def _pick_batch_pack(batch, t, cin, chid, *, target_rows=256,
                     vmem_budget_bytes=20 * 1024 * 1024):
    """Pack several samples per grid step when T is small so the MXU M dim is large.

    Only packs when T is sublane aligned (reshapes stay layout no-ops) and the rough
    f32 working set stays well inside a v7x-safe VMEM budget.
    """
    if t % 8 != 0:
        return 1
    best = 1
    for bb in range(1, batch + 1):
        if batch % bb:
            continue
        rows = bb * t
        if rows > max(target_rows, t):
            continue
        approx_bytes = 4 * (4 * rows * cin + 4 * rows * chid)   # x/out (2x buf) + ~4 hid slabs
        if approx_bytes <= vmem_budget_bytes:
            best = bb
    return best


def separable_dilated_conv1d_block(x_bct, params, *, kernel_size, dilation,
                                   use_bf16_matmul=False):
    """x_bct: [batch, feats, seq] like the PyTorch module.  Returns [batch, feats, seq]."""
    batch, cin, t = x_bct.shape
    chid = params["w1"].shape[1]
    f32 = jnp.float32
    mm_dtype = jnp.bfloat16 if use_bf16_matmul else f32

    x_btc = jnp.transpose(x_bct, (0, 2, 1)).astype(f32)          # [B, T, Cin]

    # --- host-side parameter preparation (folding / packing, done once in XLA) ---
    w1 = params["w1"].astype(mm_dtype)                           # (Cin, Chid)
    wdw = params["wdw"].astype(f32)                              # (k, Chid)
    ph = jnp.concatenate([params["b1"], params["g1"], params["be1"], params["bdw"]],
                         axis=0).astype(f32)                     # (4, Chid)
    # fold GroupNorm2 affine into the final 1x1 conv
    w3g_f32 = params["w3"] * params["g2"].reshape(chid, 1)       # (Chid, Cin)
    b3p = params["be2"] @ params["w3"] + params["b3"]            # (1, Cin)
    c3g = jnp.sum(w3g_f32, axis=0, keepdims=True)                # (1, Cin)
    w3g = w3g_f32.astype(mm_dtype)
    pi = jnp.concatenate([b3p, c3g], axis=0).astype(f32)         # (2, Cin)
    alphas = jnp.concatenate([params["a1"].reshape(1),
                              params["a2"].reshape(1)]).astype(f32)   # (2,) in SMEM

    bb = _pick_batch_pack(batch, t, cin, chid)
    rows = bb * t
    use_roll = (rows % 8 == 0)

    # precomputed 0/1 per-row tap masks (handle zero padding + sample boundaries)
    pad = dilation * (kernel_size - 1) // 2
    tpos = np.arange(rows) % t
    mask_np = np.stack(
        [((tpos + (j * dilation - pad) >= 0) & (tpos + (j * dilation - pad) < t))
         for j in range(kernel_size)], axis=1).astype(np.float32)      # (rows, k)
    masks = jnp.asarray(mask_np)

    kernel = functools.partial(_block_kernel, kernel_size=kernel_size,
                               dilation=dilation, bb=bb, t=t, use_roll=use_roll)

    def rep2(shape):
        return pl.BlockSpec(shape, lambda g: (0, 0))

    out_btc = pl.pallas_call(
        kernel,
        out_shape=jax.ShapeDtypeStruct((batch, t, cin), f32),
        grid_spec=pltpu.PrefetchScalarGridSpec(
            num_scalar_prefetch=0,
            grid=(batch // bb,),
            in_specs=[
                pl.BlockSpec((bb, t, cin), lambda g: (g, 0, 0)),      # x
                rep2((cin, chid)),                                    # w1
                rep2((kernel_size, chid)),                            # depthwise weights
                rep2((rows, kernel_size)),                            # per-row tap masks
                rep2((4, chid)),                                      # [b1; g1; be1; bdw]
                rep2((chid, cin)),                                    # g2-scaled w3
                rep2((2, cin)),                                       # [be2@w3 + b3; colsum(g2*w3)]
                pl.BlockSpec(memory_space=pltpu.MemorySpace.SMEM),    # PReLU alphas (scalars)
            ],
            out_specs=pl.BlockSpec((bb, t, cin), lambda g: (g, 0, 0)),
        ),
        compiler_params=pltpu.CompilerParams(
            dimension_semantics=("parallel",),
            vmem_limit_bytes=48 * 1024 * 1024),
    )(x_btc, w1, wdw, masks, ph, w3g, pi, alphas)

    return jnp.transpose(out_btc, (0, 2, 1))


def reference_block(x_bct, params, *, kernel_size, dilation):
    """Pure-JAX reference mirroring the PyTorch module exactly."""
    x = jnp.transpose(x_bct, (0, 2, 1))                           # (B, T, Cin)
    w1, b1, a1 = params["w1"], params["b1"], params["a1"]
    g1, be1 = params["g1"], params["be1"]
    wdw, bdw = params["wdw"], params["bdw"]
    a2, g2, be2 = params["a2"], params["g2"], params["be2"]
    w3, b3 = params["w3"], params["b3"]

    h = jnp.einsum("btc,cd->btd", x, w1) + b1
    h = jnp.where(h > 0, h, a1 * h)
    mean = jnp.mean(h, axis=(1, 2), keepdims=True)
    var = jnp.mean((h - mean) ** 2, axis=(1, 2), keepdims=True)
    h = (h - mean) * jax.lax.rsqrt(var + EPS) * g1 + be1

    pad = dilation * (kernel_size - 1) // 2
    B, T, Chid = h.shape
    hpad = jnp.pad(h, ((0, 0), (pad, pad), (0, 0)))
    acc = jnp.broadcast_to(bdw, h.shape)
    for j in range(kernel_size):
        acc = acc + wdw[j][None, None, :] * hpad[:, j * dilation:j * dilation + T, :]
    h = acc

    h = jnp.where(h > 0, h, a2 * h)
    mean = jnp.mean(h, axis=(1, 2), keepdims=True)
    var = jnp.mean((h - mean) ** 2, axis=(1, 2), keepdims=True)
    h = (h - mean) * jax.lax.rsqrt(var + EPS) * g2 + be2

    y = jnp.einsum("btd,dc->btc", h, w3) + b3
    return jnp.transpose(x + y, (0, 2, 1))


if __name__ == "__main__":
    # Small shapes consistent with the module (in_chan, hid_chan, kernel_size).
    B, Cin, Chid, T = 2, 128, 256, 16
    KERNEL_SIZE = 3

    key = jax.random.PRNGKey(0)
    ks = jax.random.split(key, 12)

    params = {
        # Conv1d(Cin->Chid, k=1): weight [Chid, Cin, 1] -> stored as [Cin, Chid]
        "w1": 0.05 * jax.random.normal(ks[0], (Cin, Chid), jnp.float32),
        "b1": 0.05 * jax.random.normal(ks[1], (1, Chid), jnp.float32),
        # PReLU (single shared parameter, PyTorch default init 0.25)
        "a1": jnp.full((1, 1), 0.25, jnp.float32),
        # GroupNorm(1, Chid) affine
        "g1": 1.0 + 0.1 * jax.random.normal(ks[2], (1, Chid), jnp.float32),
        "be1": 0.1 * jax.random.normal(ks[3], (1, Chid), jnp.float32),
        # depthwise Conv1d(Chid, k, groups=Chid): weight [Chid, 1, k] -> stored [k, Chid]
        "wdw": 0.3 * jax.random.normal(ks[4], (KERNEL_SIZE, Chid), jnp.float32),
        "bdw": 0.05 * jax.random.normal(ks[5], (1, Chid), jnp.float32),
        "a2": jnp.full((1, 1), 0.25, jnp.float32),
        "g2": 1.0 + 0.1 * jax.random.normal(ks[6], (1, Chid), jnp.float32),
        "be2": 0.1 * jax.random.normal(ks[7], (1, Chid), jnp.float32),
        # Conv1d(Chid->Cin, k=1): weight [Cin, Chid, 1] -> stored as [Chid, Cin]
        "w3": 0.05 * jax.random.normal(ks[8], (Chid, Cin), jnp.float32),
        "b3": 0.05 * jax.random.normal(ks[9], (1, Cin), jnp.float32),
    }

    # PyTorch-convention input [batch, feats, seq] = [B, Cin, T]
    x_bct = jax.random.normal(ks[10], (B, Cin, T), jnp.float32)

    # f32 path, two dilations (exercises the masked-roll taps with |shift| = 1 and 2)
    for dil in (1, 2):
        out = separable_dilated_conv1d_block(x_bct, params,
                                             kernel_size=KERNEL_SIZE, dilation=dil)
        out = jax.block_until_ready(out)
        ref = jax.block_until_ready(
            reference_block(x_bct, params, kernel_size=KERNEL_SIZE, dilation=dil))
        np.testing.assert_allclose(np.asarray(out), np.asarray(ref),
                                   rtol=1e-4, atol=1e-4)
        assert out.shape == (B, Cin, T)

    # bf16 MXU-operand path (v6e/v7x friendly); elementwise math stays f32.
    out_bf16 = jax.block_until_ready(
        separable_dilated_conv1d_block(x_bct, params, kernel_size=KERNEL_SIZE,
                                       dilation=1, use_bf16_matmul=True))
    ref = jax.block_until_ready(
        reference_block(x_bct, params, kernel_size=KERNEL_SIZE, dilation=1))
    np.testing.assert_allclose(np.asarray(out_bf16), np.asarray(ref),
                               rtol=5e-2, atol=5e-2)

    print("KERNEL_OK")
</pallas_src>

<mosaic_0001>
module attributes {stable_mosaic.version = 11 : i64} {
  func.func @_block_kernel(%arg0: i32, %arg1: memref<2x16x128xf32, #tpu.memory_space<vmem>>, %arg2: memref<128x256xf32, #tpu.memory_space<vmem>>, %arg3: memref<3x256xf32, #tpu.memory_space<vmem>>, %arg4: memref<32x3xf32, #tpu.memory_space<vmem>>, %arg5: memref<4x256xf32, #tpu.memory_space<vmem>>, %arg6: memref<256x128xf32, #tpu.memory_space<vmem>>, %arg7: memref<2x128xf32, #tpu.memory_space<vmem>>, %arg8: memref<2xf32, #tpu.memory_space<smem>>, %arg9: memref<2x16x128xf32, #tpu.memory_space<vmem>>) attributes {dimension_semantics = [#tpu.dimension_semantics<parallel>], iteration_bounds = array<i64: 1>, scalar_prefetch = 0 : i64, scratch_operands = 0 : i64, tpu.core_type = #tpu.core_type<tc>, window_params = [{transform_indices = @transform_0, window_bounds = array<i64: 2, 16, 128>}, {pipeline_mode = #tpu.pipeline_mode<synchronous>, transform_indices = @transform_1, window_bounds = array<i64: 128, 256>}, {pipeline_mode = #tpu.pipeline_mode<synchronous>, transform_indices = @transform_2, window_bounds = array<i64: 3, 256>}, {pipeline_mode = #tpu.pipeline_mode<synchronous>, transform_indices = @transform_3, window_bounds = array<i64: 32, 3>}, {pipeline_mode = #tpu.pipeline_mode<synchronous>, transform_indices = @transform_4, window_bounds = array<i64: 4, 256>}, {pipeline_mode = #tpu.pipeline_mode<synchronous>, transform_indices = @transform_5, window_bounds = array<i64: 256, 128>}, {pipeline_mode = #tpu.pipeline_mode<synchronous>, transform_indices = @transform_6, window_bounds = array<i64: 2, 128>}, {transform_indices = @transform_7, window_bounds = array<i64: 2>}, {transform_indices = @transform_8, window_bounds = array<i64: 2, 16, 128>}]} {
    %c0 = arith.constant 0 : index
    %c0_0 = arith.constant 0 : index
    %c0_1 = arith.constant 0 : index
    %0 = vector.load %arg1[%c0, %c0_0, %c0_1] : memref<2x16x128xf32, #tpu.memory_space<vmem>>, vector<2x16x128xf32>
    %1 = vector.shape_cast %0 : vector<2x16x128xf32> to vector<32x128xf32>
    %c0_2 = arith.constant 0 : index
    %2 = memref.load %arg8[%c0_2] : memref<2xf32, #tpu.memory_space<smem>>
    %c1 = arith.constant 1 : index
    %3 = memref.load %arg8[%c1] : memref<2xf32, #tpu.memory_space<smem>>
    %c0_3 = arith.constant 0 : index
    %c0_4 = arith.constant 0 : index
    %4 = vector.load %arg5[%c0_3, %c0_4] : memref<4x256xf32, #tpu.memory_space<vmem>>, vector<1x256xf32>
    %c1_5 = arith.constant 1 : index
    %c0_6 = arith.constant 0 : index
    %5 = vector.load %arg5[%c1_5, %c0_6] : memref<4x256xf32, #tpu.memory_space<vmem>>, vector<1x256xf32>
    %c2 = arith.constant 2 : index
    %c0_7 = arith.constant 0 : index
    %6 = vector.load %arg5[%c2, %c0_7] : memref<4x256xf32, #tpu.memory_space<vmem>>, vector<1x256xf32>
    %c3 = arith.constant 3 : index
    %c0_8 = arith.constant 0 : index
    %7 = vector.load %arg5[%c3, %c0_8] : memref<4x256xf32, #tpu.memory_space<vmem>>, vector<1x256xf32>
    %c0_9 = arith.constant 0 : index
    %c0_10 = arith.constant 0 : index
    %8 = vector.load %arg2[%c0_9, %c0_10] : memref<128x256xf32, #tpu.memory_space<vmem>>, vector<128x256xf32>
    %cst = arith.constant dense<0.000000e+00> : vector<32x256xf32>
    %9 = tpu.matmul %1, %8, %cst {dimension_numbers = #tpu.dot_dimension_numbers<[1], [0], [0], [1], [0, 0, 1, 1], [], []>} : vector<32x128xf32>, vector<128x256xf32>, vector<32x256xf32> -> vector<32x256xf32>
    %10 = vector.broadcast %4 : vector<1x256xf32> to vector<32x256xf32>
    %11 = arith.addf %9, %10 : vector<32x256xf32>
    %cst_11 = arith.constant 0.000000e+00 : f32
    %12 = vector.broadcast %cst_11 : f32 to vector<32x256xf32>
    %13 = arith.cmpf ogt, %11, %12 : vector<32x256xf32>
    %14 = vector.broadcast %2 : f32 to vector<32x256xf32>
    %15 = arith.mulf %14, %11 : vector<32x256xf32>
    %16 = arith.select %13, %11, %15 : vector<32x256xi1>, vector<32x256xf32>
    %17 = vector.shape_cast %16 : vector<32x256xf32> to vector<2x16x256xf32>
    %cst_12 = arith.constant dense<0.000000e+00> : vector<2x16xf32>
    %18 = vector.multi_reduction <add>, %17, %cst_12 [2] : vector<2x16x256xf32> to vector<2x16xf32>
    %19 = vector.shape_cast %18 : vector<2x16xf32> to vector<2x16x1xf32>
    %cst_13 = arith.constant dense<0.000000e+00> : vector<2x1xf32>
    %20 = vector.multi_reduction <add>, %19, %cst_13 [1] : vector<2x16x1xf32> to vector<2x1xf32>
    %21 = vector.shape_cast %20 : vector<2x1xf32> to vector<2x1x1xf32>
    %22 = arith.mulf %17, %17 : vector<2x16x256xf32>
    %cst_14 = arith.constant dense<0.000000e+00> : vector<2x16xf32>
    %23 = vector.multi_reduction <add>, %22, %cst_14 [2] : vector<2x16x256xf32> to vector<2x16xf32>
    %24 = vector.shape_cast %23 : vector<2x16xf32> to vector<2x16x1xf32>
    %cst_15 = arith.constant dense<0.000000e+00> : vector<2x1xf32>
    %25 = vector.multi_reduction <add>, %24, %cst_15 [1] : vector<2x16x1xf32> to vector<2x1xf32>
    %26 = vector.shape_cast %25 : vector<2x1xf32> to vector<2x1x1xf32>
    %cst_16 = arith.constant 2.44140625E-4 : f32
    %27 = vector.broadcast %cst_16 : f32 to vector<2x1x1xf32>
    %28 = arith.mulf %21, %27 : vector<2x1x1xf32>
    %cst_17 = arith.constant 2.44140625E-4 : f32
    %29 = vector.broadcast %cst_17 : f32 to vector<2x1x1xf32>
    %30 = arith.mulf %26, %29 : vector<2x1x1xf32>
    %31 = arith.mulf %28, %28 : vector<2x1x1xf32>
    %32 = arith.subf %30, %31 : vector<2x1x1xf32>
    %cst_18 = arith.constant 9.99999993E-9 : f32
    %33 = vector.broadcast %cst_18 : f32 to vector<2x1x1xf32>
    %34 = arith.addf %32, %33 : vector<2x1x1xf32>
    %35 = math.rsqrt %34 : vector<2x1x1xf32>
    %36 = vector.shape_cast %5 : vector<1x256xf32> to vector<1x1x256xf32>
    %37 = vector.broadcast %35 : vector<2x1x1xf32> to vector<2x1x256xf32>
    %38 = vector.broadcast %36 : vector<1x1x256xf32> to vector<2x1x256xf32>
    %39 = arith.mulf %37, %38 : vector<2x1x256xf32>
    %40 = vector.shape_cast %6 : vector<1x256xf32> to vector<1x1x256xf32>
    %41 = vector.broadcast %28 : vector<2x1x1xf32> to vector<2x1x256xf32>
    %42 = arith.mulf %41, %39 : vector<2x1x256xf32>
    %43 = vector.broadcast %40 : vector<1x1x256xf32> to vector<2x1x256xf32>
    %44 = arith.subf %43, %42 : vector<2x1x256xf32>
    %45 = vector.broadcast %39 : vector<2x1x256xf32> to vector<2x16x256xf32>
    %46 = arith.mulf %17, %45 : vector<2x16x256xf32>
    %47 = vector.broadcast %44 : vector<2x1x256xf32> to vector<2x16x256xf32>
    %48 = arith.addf %46, %47 : vector<2x16x256xf32>
    %49 = vector.shape_cast %48 : vector<2x16x256xf32> to vector<32x256xf32>
    %c0_19 = arith.constant 0 : index
    %c0_20 = arith.constant 0 : index
    %50 = vector.load %arg3[%c0_19, %c0_20] : memref<3x256xf32, #tpu.memory_space<vmem>>, vector<1x256xf32>
    %c1_i32 = arith.constant 1 : i32
    %51 = tpu.dynamic_rotate %49 by %c1_i32 dim 0 : vector<32x256xf32>, i32 -> vector<32x256xf32>
    %52 = vector.broadcast %50 : vector<1x256xf32> to vector<32x256xf32>
    %53 = arith.mulf %52, %51 : vector<32x256xf32>
    %c0_21 = arith.constant 0 : index
    %c0_22 = arith.constant 0 : index
    %54 = vector.load %arg4[%c0_21, %c0_22] : memref<32x3xf32, #tpu.memory_space<vmem>>, vector<32x1xf32>
    %55 = vector.broadcast %54 : vector<32x1xf32> to vector<32x256xf32>
    %56 = arith.mulf %53, %55 : vector<32x256xf32>
    %c1_23 = arith.constant 1 : index
    %c0_24 = arith.constant 0 : index
    %57 = vector.load %arg3[%c1_23, %c0_24] : memref<3x256xf32, #tpu.memory_space<vmem>>, vector<1x256xf32>
    %58 = vector.broadcast %57 : vector<1x256xf32> to vector<32x256xf32>
    %59 = arith.mulf %58, %49 : vector<32x256xf32>
    %60 = arith.addf %56, %59 : vector<32x256xf32>
    %c2_25 = arith.constant 2 : index
    %c0_26 = arith.constant 0 : index
    %61 = vector.load %arg3[%c2_25, %c0_26] : memref<3x256xf32, #tpu.memory_space<vmem>>, vector<1x256xf32>
    %c31_i32 = arith.constant 31 : i32
    %62 = tpu.dynamic_rotate %49 by %c31_i32 dim 0 : vector<32x256xf32>, i32 -> vector<32x256xf32>
    %63 = vector.broadcast %61 : vector<1x256xf32> to vector<32x256xf32>
    %64 = arith.mulf %63, %62 : vector<32x256xf32>
    %c0_27 = arith.constant 0 : index
    %c2_28 = arith.constant 2 : index
    %65 = vector.load %arg4[%c0_27, %c2_28] : memref<32x3xf32, #tpu.memory_space<vmem>>, vector<32x1xf32>
    %66 = vector.broadcast %65 : vector<32x1xf32> to vector<32x256xf32>
    %67 = arith.mulf %64, %66 : vector<32x256xf32>
    %68 = arith.addf %60, %67 : vector<32x256xf32>
    %69 = vector.broadcast %7 : vector<1x256xf32> to vector<32x256xf32>
    %70 = arith.addf %68, %69 : vector<32x256xf32>
    %cst_29 = arith.constant 0.000000e+00 : f32
    %71 = vector.broadcast %cst_29 : f32 to vector<32x256xf32>
    %72 = arith.cmpf ogt, %70, %71 : vector<32x256xf32>
    %73 = vector.broadcast %3 : f32 to vector<32x256xf32>
    %74 = arith.mulf %73, %70 : vector<32x256xf32>
    %75 = arith.select %72, %70, %74 : vector<32x256xi1>, vector<32x256xf32>
    %76 = vector.shape_cast %75 : vector<32x256xf32> to vector<2x16x256xf32>
    %cst_30 = arith.constant dense<0.000000e+00> : vector<2x16xf32>
    %77 = vector.multi_reduction <add>, %76, %cst_30 [2] : vector<2x16x256xf32> to vector<2x16xf32>
    %78 = vector.shape_cast %77 : vector<2x16xf32> to vector<2x16x1xf32>
    %cst_31 = arith.constant dense<0.000000e+00> : vector<2x1xf32>
    %79 = vector.multi_reduction <add>, %78, %cst_31 [1] : vector<2x16x1xf32> to vector<2x1xf32>
    %80 = vector.shape_cast %79 : vector<2x1xf32> to vector<2x1x1xf32>
    %81 = arith.mulf %76, %76 : vector<2x16x256xf32>
    %cst_32 = arith.constant dense<0.000000e+00> : vector<2x16xf32>
    %82 = vector.multi_reduction <add>, %81, %cst_32 [2] : vector<2x16x256xf32> to vector<2x16xf32>
    %83 = vector.shape_cast %82 : vector<2x16xf32> to vector<2x16x1xf32>
    %cst_33 = arith.constant dense<0.000000e+00> : vector<2x1xf32>
    %84 = vector.multi_reduction <add>, %83, %cst_33 [1] : vector<2x16x1xf32> to vector<2x1xf32>
    %85 = vector.shape_cast %84 : vector<2x1xf32> to vector<2x1x1xf32>
    %cst_34 = arith.constant 2.44140625E-4 : f32
    %86 = vector.broadcast %cst_34 : f32 to vector<2x1x1xf32>
    %87 = arith.mulf %80, %86 : vector<2x1x1xf32>
    %cst_35 = arith.constant 2.44140625E-4 : f32
    %88 = vector.broadcast %cst_35 : f32 to vector<2x1x1xf32>
    %89 = arith.mulf %85, %88 : vector<2x1x1xf32>
    %90 = arith.mulf %87, %87 : vector<2x1x1xf32>
    %91 = arith.subf %89, %90 : vector<2x1x1xf32>
    %cst_36 = arith.constant 9.99999993E-9 : f32
    %92 = vector.broadcast %cst_36 : f32 to vector<2x1x1xf32>
    %93 = arith.addf %91, %92 : vector<2x1x1xf32>
    %94 = math.rsqrt %93 : vector<2x1x1xf32>
    %c0_37 = arith.constant 0 : index
    %c0_38 = arith.constant 0 : index
    %95 = vector.load %arg6[%c0_37, %c0_38] : memref<256x128xf32, #tpu.memory_space<vmem>>, vector<256x128xf32>
    %cst_39 = arith.constant dense<0.000000e+00> : vector<32x128xf32>
    %96 = tpu.matmul %75, %95, %cst_39 {dimension_numbers = #tpu.dot_dimension_numbers<[1], [0], [0], [1], [0, 0, 1, 1], [], []>} : vector<32x256xf32>, vector<256x128xf32>, vector<32x128xf32> -> vector<32x128xf32>
    %97 = vector.shape_cast %96 : vector<32x128xf32> to vector<2x16x128xf32>
    %c0_40 = arith.constant 0 : index
    %c0_41 = arith.constant 0 : index
    %98 = vector.load %arg7[%c0_40, %c0_41] : memref<2x128xf32, #tpu.memory_space<vmem>>, vector<1x128xf32>
    %99 = vector.shape_cast %98 : vector<1x128xf32> to vector<1x1x128xf32>
    %c1_42 = arith.constant 1 : index
    %c0_43 = arith.constant 0 : index
    %100 = vector.load %arg7[%c1_42, %c0_43] : memref<2x128xf32, #tpu.memory_space<vmem>>, vector<1x128xf32>
    %101 = vector.shape_cast %100 : vector<1x128xf32> to vector<1x1x128xf32>
    %102 = arith.mulf %87, %94 : vector<2x1x1xf32>
    %103 = vector.broadcast %102 : vector<2x1x1xf32> to vector<2x1x128xf32>
    %104 = vector.broadcast %101 : vector<1x1x128xf32> to vector<2x1x128xf32>
    %105 = arith.mulf %103, %104 : vector<2x1x128xf32>
    %106 = vector.broadcast %99 : vector<1x1x128xf32> to vector<2x1x128xf32>
    %107 = arith.subf %106, %105 : vector<2x1x128xf32>
    %108 = vector.broadcast %94 : vector<2x1x1xf32> to vector<2x16x128xf32>
    %109 = arith.mulf %97, %108 : vector<2x16x128xf32>
    %110 = arith.addf %0, %109 : vector<2x16x128xf32>
    %111 = vector.broadcast %107 : vector<2x1x128xf32> to vector<2x16x128xf32>
    %112 = arith.addf %110, %111 : vector<2x16x128xf32>
    %c0_44 = arith.constant 0 : index
    %c0_45 = arith.constant 0 : index
    %c0_46 = arith.constant 0 : index
    %113 = vector.load %arg9[%c0_44, %c0_45, %c0_46] : memref<2x16x128xf32, #tpu.memory_space<vmem>>, vector<2x16x128xf32>
    tpu.vector_store %arg9[%c0_44, %c0_45, %c0_46], %112 {strides = array<i32>} : memref<2x16x128xf32, #tpu.memory_space<vmem>>, vector<2x16x128xf32>,
    return
  }
  func.func @transform_0(%arg0: i32) -> (i32, i32, i32) {
    %c0_i32 = arith.constant 0 : i32
    %c0_i32_0 = arith.constant 0 : i32
    %c0_i32_1 = arith.constant 0 : i32
    return %arg0, %c0_i32, %c0_i32_0 : i32, i32, i32
  }
  func.func @transform_1(%arg0: i32) -> (i32, i32) {
    %c0_i32 = arith.constant 0 : i32
    %c0_i32_0 = arith.constant 0 : i32
    %c0_i32_1 = arith.constant 0 : i32
    return %c0_i32, %c0_i32_0 : i32, i32
  }
  func.func @transform_2(%arg0: i32) -> (i32, i32) {
    %c0_i32 = arith.constant 0 : i32
    %c0_i32_0 = arith.constant 0 : i32
    %c0_i32_1 = arith.constant 0 : i32
    return %c0_i32, %c0_i32_0 : i32, i32
  }
  func.func @transform_3(%arg0: i32) -> (i32, i32) {
    %c0_i32 = arith.constant 0 : i32
    %c0_i32_0 = arith.constant 0 : i32
    %c0_i32_1 = arith.constant 0 : i32
    return %c0_i32, %c0_i32_0 : i32, i32
  }
  func.func @transform_4(%arg0: i32) -> (i32, i32) {
    %c0_i32 = arith.constant 0 : i32
    %c0_i32_0 = arith.constant 0 : i32
    %c0_i32_1 = arith.constant 0 : i32
    return %c0_i32, %c0_i32_0 : i32, i32
  }
  func.func @transform_5(%arg0: i32) -> (i32, i32) {
    %c0_i32 = arith.constant 0 : i32
    %c0_i32_0 = arith.constant 0 : i32
    %c0_i32_1 = arith.constant 0 : i32
    return %c0_i32, %c0_i32_0 : i32, i32
  }
  func.func @transform_6(%arg0: i32) -> (i32, i32) {
    %c0_i32 = arith.constant 0 : i32
    %c0_i32_0 = arith.constant 0 : i32
    %c0_i32_1 = arith.constant 0 : i32
    return %c0_i32, %c0_i32_0 : i32, i32
  }
  func.func @transform_7(%arg0: i32) -> i32 {
    %c0_i32 = arith.constant 0 : i32
    %c0_i32_0 = arith.constant 0 : i32
    return %c0_i32 : i32
  }
  func.func @transform_8(%arg0: i32) -> (i32, i32, i32) {
    %c0_i32 = arith.constant 0 : i32
    %c0_i32_0 = arith.constant 0 : i32
    %c0_i32_1 = arith.constant 0 : i32
    return %arg0, %c0_i32, %c0_i32_0 : i32, i32, i32
  }
}

</mosaic_0001>

<llo_original>
// kernel: tpu_custom_call.1
$region0: #{tpu_custom_call.1}
  #allocation0 [shape = 'u32[]', space=smem, size = 0x4, offset = 0x4, fixed_abs, tag = 'smem constant byte address 0x4 - core index']
  #allocation1 [shape = 'u32[144,128]{1,0:T(1,128)}', space=vmem, size = 0x12000, scoped, tag = 'internal scratch']
  %s0 = inlined_call_operand.vmem [shape: f32[2,16,128], index: 0, kind: input, shape index: {}]
  %s1 = inlined_call_operand.hbm [shape: f32[128,256], index: 1, kind: input, shape index: {}]
  %s2 = inlined_call_operand.vmem [shape: f32[3,256], index: 2, kind: input, shape index: {}]
  %s3 = inlined_call_operand.vmem [shape: f32[32,3], index: 3, kind: input, shape index: {}]
  %s4 = inlined_call_operand.vmem [shape: f32[4,256], index: 4, kind: input, shape index: {}]
  %s5 = inlined_call_operand.hbm [shape: f32[256,128], index: 5, kind: input, shape index: {}]
  %s6 = inlined_call_operand.vmem [shape: f32[2,128], index: 6, kind: input, shape index: {}]
  %s7 = inlined_call_operand.vmem [shape: f32[2], index: 7, kind: input, shape index: {}]
  %s8 = inlined_call_operand.hbm [shape: f32[2,16,128], index: 8, kind: output, shape index: {}]
  %s9 = sld [smem:[#allocation0]]
  $region54: #{tpu_custom_call.1} parent=0
    _
  %s11 = ssub.s32 1, %s9
  %s12 = scalar_select 0, %s11, %s9
  $region1: #{tpu_custom_call.1} parent=0
    #allocation2 [shape = 'u8[131072]{0}', space=vmem, size = 0x20000, scoped, tag = 'input window, operand 1, single buffered']
    #allocation3 [shape = 's32[1]{0}', space=sflag, size = 0x4, scoped, tag = 'scoped memory for tpu_custom_call.1']
    #allocation4 [shape = 's32[1]{0}', space=sflag, size = 0x4, scoped, tag = 'scoped memory for tpu_custom_call.1']
    #allocation5 [shape = 's32[1]{0}', space=sflag, size = 0x4, scoped, tag = 'scoped memory for tpu_custom_call.1']
    #allocation6 [shape = 'u8[131072]{0}', space=vmem, size = 0x20000, scoped, tag = 'input window, operand 5, single buffered']
    #allocation7 [shape = 's32[1]{0}', space=sflag, size = 0x4, scoped, tag = 'scoped memory for tpu_custom_call.1']
    #allocation8 [shape = 'u8[512]{0}', space=smem, size = 0x200, scoped, tag = 'input window, operand 7, single buffered']
    #allocation9 [shape = 'u8[16384]{0}', space=vmem, size = 0x4000, scoped, tag = 'output window, operand 0, single buffered']
    %13 = vsyncpa [#allocation3], 0
    %14 = vsyncpa [#allocation7], 0
    %15 = vsyncpa [#allocation5], 0
    %16 = vsyncpa [#allocation4], 0
    // Predicated region
    $region2: #{tpu_custom_call.1} parent=1 // pred_check
      _
    $region3: #{tpu_custom_call.1} parent=1 // pred_check_branch
      %18 = sbr.rel (0) target = $region5
    $region4: #{tpu_custom_call.1} parent=1 // pred_region
      _
    $region5: #{tpu_custom_call.1} parent=1 // pred_fallthru
      _
    // Predicated region
    $region6: #{tpu_custom_call.1} parent=1 // pred_check
      _
    $region7: #{tpu_custom_call.1} parent=1 // pred_check_branch
      %20 = sbr.rel (0) target = $region9
    $region8: #{tpu_custom_call.1} parent=1 // pred_region
      %s22 = ssub.s32 4096, 4096
      %23 = vsyncadd [#allocation3], %s22
      %s24 = sshll.u32 [#allocation2], 4
      %s25 = int_to_ptr.vmem [resolvable:$true] %s24
      %30 = dma.hbm_to_vmem [thread:$0]  %s1, 4096, %s25, [#allocation3], 256, 256, 16
    $region9: #{tpu_custom_call.1} parent=1 // pred_fallthru
      _
    // Predicated region
    $region10: #{tpu_custom_call.1} parent=1 // pred_check
      _
    $region11: #{tpu_custom_call.1} parent=1 // pred_check_branch
      %32 = sbr.rel (0) target = $region13
    $region12: #{tpu_custom_call.1} parent=1 // pred_region
      _
    $region13: #{tpu_custom_call.1} parent=1 // pred_fallthru
      _
    // Predicated region
    $region14: #{tpu_custom_call.1} parent=1 // pred_check
      _
    $region15: #{tpu_custom_call.1} parent=1 // pred_check_branch
      %34 = sbr.rel (0) target = $region17
    $region16: #{tpu_custom_call.1} parent=1 // pred_region
      _
    $region17: #{tpu_custom_call.1} parent=1 // pred_fallthru
      _
    // Predicated region
    $region18: #{tpu_custom_call.1} parent=1 // pred_check
      _
    $region19: #{tpu_custom_call.1} parent=1 // pred_check_branch
      %36 = sbr.rel (0) target = $region21
    $region20: #{tpu_custom_call.1} parent=1 // pred_region
      _
    $region21: #{tpu_custom_call.1} parent=1 // pred_fallthru
      _
    // Predicated region
    $region22: #{tpu_custom_call.1} parent=1 // pred_check
      _
    $region23: #{tpu_custom_call.1} parent=1 // pred_check_branch
      %38 = sbr.rel (0) target = $region25
    $region24: #{tpu_custom_call.1} parent=1 // pred_region
      %s40 = ssub.s32 4096, 4096
      %41 = vsyncadd [#allocation7], %s40
      %s42 = sshll.u32 [#allocation6], 4
      %s43 = int_to_ptr.vmem [resolvable:$true] %s42
      %48 = dma.hbm_to_vmem [thread:$0]  %s5, 4096, %s43, [#allocation7], 128, 128, 8
    $region25: #{tpu_custom_call.1} parent=1 // pred_fallthru
      _
    // Predicated region
    $region26: #{tpu_custom_call.1} parent=1 // pred_check
      _
    $region27: #{tpu_custom_call.1} parent=1 // pred_check_branch
      %50 = sbr.rel (0) target = $region29
    $region28: #{tpu_custom_call.1} parent=1 // pred_region
      _
    $region29: #{tpu_custom_call.1} parent=1 // pred_fallthru
      _
    // Predicated region
    $region30: #{tpu_custom_call.1} parent=1 // pred_check
      _
    $region31: #{tpu_custom_call.1} parent=1 // pred_check_branch
      %52 = sbr.rel (0) target = $region33
    $region32: #{tpu_custom_call.1} parent=1 // pred_region
      %s54 = ssub.s32 16, 16
      %55 = vsyncadd [#allocation5], %s54
      %s57 = sshll.u32 %s7, 4
      %s58 = int_to_ptr.vmem [resolvable:$true] %s57
      %60 = dma.vmem_to_smem %s58, 16, [#allocation8], [#allocation5]
    $region33: #{tpu_custom_call.1} parent=1 // pred_fallthru
      _
    // Predicated region
    $region34: #{tpu_custom_call.1} parent=1 // pred_check
      _
    $region35: #{tpu_custom_call.1} parent=1 // pred_check_branch
      %62 = sbr.rel (0) target = $region37
    $region36: #{tpu_custom_call.1} parent=1 // pred_region
      %63 = dma.done [#allocation3], 4096
    $region37: #{tpu_custom_call.1} parent=1 // pred_fallthru
      _
    // Predicated region
    $region38: #{tpu_custom_call.1} parent=1 // pred_check
      _
    $region39: #{tpu_custom_call.1} parent=1 // pred_check_branch
      %65 = sbr.rel (0) target = $region41
    $region40: #{tpu_custom_call.1} parent=1 // pred_region
      %66 = dma.done [#allocation7], 4096
    $region41: #{tpu_custom_call.1} parent=1 // pred_fallthru
      _
    // Predicated region
    $region42: #{tpu_custom_call.1} parent=1 // pred_check
      _
    $region43: #{tpu_custom_call.1} parent=1 // pred_check_branch
      %68 = sbr.rel (0) target = $region45
    $region44: #{tpu_custom_call.1} parent=1 // pred_region
      %69 = dma.done [#allocation5], 16
    $region45: #{tpu_custom_call.1} parent=1 // pred_fallthru
      _
    %70 = sfence
    %v71 = vld [vmem:[%s0] sm:$0xff]
    %v72 = vld [vmem:[%s0 + $0x8] sm:$0xff]
    %v73 = vld [vmem:[%s0 + $0x10] sm:$0xff]
    %v74 = vld [vmem:[%s0 + $0x18] sm:$0xff]
    %s75 = sld [smem:[#allocation8]]
    %s76 = sld [smem:[#allocation8 + $0x1]]
    %v77 = vld [vmem:[%s4] ss:$4 sm:$0x3]
    %s78 = scalar_lea.vmem %s4, 1
    %v79 = vld [vmem:[%s78] ss:$4 sm:$0x3]
    %s80 = scalar_lea.vmem %s4, 2
    %v81 = vld [vmem:[%s80] ss:$4 sm:$0x3]
    %s82 = scalar_lea.vmem %s4, 3
    %v83 = vld [vmem:[%s82] ss:$4 sm:$0x3]
    %v84 = vld [vmem:[#allocation2] sm:$0xff]
    %v85 = vld [vmem:[#allocation2 + $0x8] sm:$0xff]
    %v86 = vld [vmem:[#allocation2 + $0x10] sm:$0xff]
    %v87 = vld [vmem:[#allocation2 + $0x18] sm:$0xff]
    %v88 = vld [vmem:[#allocation2 + $0x20] sm:$0xff]
    %v89 = vld [vmem:[#allocation2 + $0x28] sm:$0xff]
    %v90 = vld [vmem:[#allocation2 + $0x30] sm:$0xff]
    %v91 = vld [vmem:[#allocation2 + $0x38] sm:$0xff]
    %v92 = vld [vmem:[#allocation2 + $0x40] sm:$0xff]
    %v93 = vld [vmem:[#allocation2 + $0x48] sm:$0xff]
    %v94 = vld [vmem:[#allocation2 + $0x50] sm:$0xff]
    %v95 = vld [vmem:[#allocation2 + $0x58] sm:$0xff]
    %v96 = vld [vmem:[#allocation2 + $0x60] sm:$0xff]
    %v97 = vld [vmem:[#allocation2 + $0x68] sm:$0xff]
    %v98 = vld [vmem:[#allocation2 + $0x70] sm:$0xff]
    %v99 = vld [vmem:[#allocation2 + $0x78] sm:$0xff]
    %v100 = vld [vmem:[#allocation2 + $0x80] sm:$0xff]
    %v101 = vld [vmem:[#allocation2 + $0x88] sm:$0xff]
    %v102 = vld [vmem:[#allocation2 + $0x90] sm:$0xff]
    %v103 = vld [vmem:[#allocation2 + $0x98] sm:$0xff]
    %v104 = vld [vmem:[#allocation2 + $0xa0] sm:$0xff]
    %v105 = vld [vmem:[#allocation2 + $0xa8] sm:$0xff]
    %v106 = vld [vmem:[#allocation2 + $0xb0] sm:$0xff]
    %v107 = vld [vmem:[#allocation2 + $0xb8] sm:$0xff]
    %v108 = vld [vmem:[#allocation2 + $0xc0] sm:$0xff]
    %v109 = vld [vmem:[#allocation2 + $0xc8] sm:$0xff]
    %v110 = vld [vmem:[#allocation2 + $0xd0] sm:$0xff]
    %v111 = vld [vmem:[#allocation2 + $0xd8] sm:$0xff]
    %v112 = vld [vmem:[#allocation2 + $0xe0] sm:$0xff]
    %v113 = vld [vmem:[#allocation2 + $0xe8] sm:$0xff]
    %v114 = vld [vmem:[#allocation2 + $0xf0] sm:$0xff]
    %v115 = vld [vmem:[#allocation2 + $0xf8] sm:$0xff]
    %v117 = vlaneseq
    %v118 = vshrl.u32 %v117, 7
    %v119 = vsub.s32 0, %v118
    %v120 = vrot.slane %v77, %v119
    %v121 = vlaneseq
    %v122 = vshrl.u32 %v121, 7
    %v123 = vsub.s32 1, %v122
    %v124 = vrot.slane %v77, %v123
    %127 = vmatprep.subr.mxu0 %v85
    %128 = vmatpush1.msra.mxu0 %v84
    %129 = vmatprep.subr.mxu0 %v87
    %130 = vmatpush1.msra.mxu0 %v86
    %131 = vmatprep.subr.mxu0 %v89
    %132 = vmatpush1.msra.mxu0 %v88
    %133 = vmatprep.subr.mxu0 %v91
    %134 = vmatpush1.msra.mxu0 %v90
    %135 = vmatprep.subr.mxu0 %v93
    %136 = vmatpush1.msra.mxu0 %v92
    %137 = vmatprep.subr.mxu0 %v95
    %138 = vmatpush1.msra.mxu0 %v94
    %139 = vmatprep.subr.mxu0 %v97
    %140 = vmatpush1.msra.mxu0 %v96
    %141 = vmatprep.subr.mxu0 %v99
    %142 = vmatpush1.msra.mxu0 %v98
    %143 = vmatprep.subr.mxu0 %v101
    %144 = vmatpush1.msra.mxu0 %v100
    %145 = vmatprep.subr.mxu0 %v103
    %146 = vmatpush1.msra.mxu0 %v102
    %147 = vmatprep.subr.mxu0 %v105
    %148 = vmatpush1.msra.mxu0 %v104
    %149 = vmatprep.subr.mxu0 %v107
    %150 = vmatpush1.msra.mxu0 %v106
    %151 = vmatprep.subr.mxu0 %v109
    %152 = vmatpush1.msra.mxu0 %v108
    %153 = vmatprep.subr.mxu0 %v111
    %154 = vmatpush1.msra.mxu0 %v110
    %155 = vmatprep.subr.mxu0 %v113
    %156 = vmatpush1.msra.mxu0 %v112
    %157 = vmatprep.subr.mxu0 %v115
    %158 = vmatpush1.msra.mxu0 %v114
    %159 = vmatprep.subr.mxu0 0.0
    %160 = vmatpush1.msra.mxu0 0.0
    %161 = vmatprep.subr.mxu0 0.0
    %162 = vmatpush1.msra.mxu0 0.0
    %163 = vmatprep.subr.mxu0 0.0
    %164 = vmatpush1.msra.mxu0 0.0
    %165 = vmatprep.subr.mxu0 0.0
    %166 = vmatpush1.msra.mxu0 0.0
    %167 = vmatprep.subr.mxu0 0.0
    %168 = vmatpush1.msra.mxu0 0.0
    %169 = vmatprep.subr.mxu0 0.0
    %170 = vmatpush1.msra.mxu0 0.0
    %171 = vmatprep.subr.mxu0 0.0
    %172 = vmatpush1.msra.mxu0 0.0
    %173 = vmatprep.subr.mxu0 0.0
    %174 = vmatpush1.msra.mxu0 0.0
    %175 = vmatprep.subr.mxu0 0.0
    %176 = vmatpush1.msra.mxu0 0.0
    %177 = vmatprep.subr.mxu0 0.0
    %178 = vmatpush1.msra.mxu0 0.0
    %179 = vmatprep.subr.mxu0 0.0
    %180 = vmatpush1.msra.mxu0 0.0
    %181 = vmatprep.subr.mxu0 0.0
    %182 = vmatpush1.msra.mxu0 0.0
    %183 = vmatprep.subr.mxu0 0.0
    %184 = vmatpush1.msra.mxu0 0.0
    %185 = vmatprep.subr.mxu0 0.0
    %186 = vmatpush1.msra.mxu0 0.0
    %187 = vmatprep.subr.mxu0 0.0
    %188 = vmatpush1.msra.mxu0 0.0
    %189 = vmatprep.subr.mxu0 0.0
    %190 = vmatpush1.msra.mxu0 0.0
    %191 = vmatprep.mubr.f32.mxu0 0.0
    %192 = vmatmul.mubr.f32.gmra.mrb[0].mxu0 %v71
    %v193 = vpop.f32.mrb[0].mxu0
    %v194 = vadd.f32 %v120, %v193
    %v195 = vpop.f32.mrb[0].mxu0
    %v196 = vadd.f32 %v124, %v195
    %197 = vmatprep.mubr.f32.mxu0 0.0
    %198 = vmatmul.mubr.f32.gmra.mrb[0].mxu0 %v72
    %v199 = vpop.f32.mrb[0].mxu0
    %v200 = vadd.f32 %v120, %v199
    %v201 = vpop.f32.mrb[0].mxu0
    %v202 = vadd.f32 %v124, %v201
    %203 = vmatprep.mubr.f32.mxu0 0.0
    %204 = vmatmul.mubr.f32.gmra.mrb[0].mxu0 %v73
    %v205 = vpop.f32.mrb[0].mxu0
    %v206 = vadd.f32 %v120, %v205
    %v207 = vpop.f32.mrb[0].mxu0
    %v208 = vadd.f32 %v124, %v207
    %209 = vmatprep.mubr.f32.mxu0 0.0
    %210 = vmatmul.mubr.f32.gmra.mrb[0].mxu0 %v74
    %v211 = vpop.f32.mrb[0].mxu0
    %v212 = vadd.f32 %v120, %v211
    %v213 = vpop.f32.mrb[0].mxu0
    %v214 = vadd.f32 %v124, %v213
    %215 = vdwg.mxu0
    %vm216 = vcmp.gt.f32.partialorder %v194, 0.0
    %vm217 = vcmp.gt.f32.partialorder %v196, 0.0
    %vm218 = vcmp.gt.f32.partialorder %v200, 0.0
    %vm219 = vcmp.gt.f32.partialorder %v202, 0.0
    %vm220 = vcmp.gt.f32.partialorder %v206, 0.0
    %vm221 = vcmp.gt.f32.partialorder %v208, 0.0
    %vm222 = vcmp.gt.f32.partialorder %v212, 0.0
    %vm223 = vcmp.gt.f32.partialorder %v214, 0.0
    %v224 = vstv %s75
    %v225 = vmul.f32 %v224, %v194
    %v226 = vmul.f32 %v224, %v196
    %v227 = vmul.f32 %v224, %v200
    %v228 = vmul.f32 %v224, %v202
    %v229 = vmul.f32 %v224, %v206
    %v230 = vmul.f32 %v224, %v208
    %v231 = vmul.f32 %v224, %v212
    %v232 = vmul.f32 %v224, %v214
    %v233 = vsel %vm216, %v194, %v225
    %v234 = vsel %vm217, %v196, %v226
    %v235 = vsel %vm218, %v200, %v227
    %v236 = vsel %vm219, %v202, %v228
    %v237 = vsel %vm220, %v206, %v229
    %v238 = vsel %vm221, %v208, %v230
    %v239 = vsel %vm222, %v212, %v231
    %v240 = vsel %vm223, %v214, %v232
    %v241 = vadd.f32 %v233, %v234
    %242 = vadd.xlane.f32.xlu0 %v241
    %v243 = vpop.xlane.xlu0 %242
    %v244 = vadd.f32 %v235, %v236
    %245 = vadd.xlane.f32.xlu0 %v244
    %v246 = vpop.xlane.xlu0 %245
    %v247 = vadd.f32 %v237, %v238
    %248 = vadd.xlane.f32.xlu0 %v247
    %v249 = vpop.xlane.xlu0 %248
    %v250 = vadd.f32 %v239, %v240
    %251 = vadd.xlane.f32.xlu0 %v250
    %v252 = vpop.xlane.xlu0 %251
    %v253 = vadd.f32 %v243, %v246
    %v254 = vrot.slane %v253, 4
    %v255 = vadd.f32 %v253, %v254
    %v256 = vrot.slane %v255, 2
    %v257 = vadd.f32 %v255, %v256
    %v258 = vrot.slane %v257, 1
    %v259 = vadd.f32 %v257, %v258
    %v260 = vadd.f32 %v249, %v252
    %v261 = vrot.slane %v260, 4
    %v262 = vadd.f32 %v260, %v261
    %v263 = vrot.slane %v262, 2
    %v264 = vadd.f32 %v262, %v263
    %v265 = vrot.slane %v264, 1
    %v266 = vadd.f32 %v264, %v265
    %v267 = vmul.f32 %v233, %v233
    %v268 = vmul.f32 %v234, %v234
    %v269 = vmul.f32 %v235, %v235
    %v270 = vmul.f32 %v236, %v236
    %v271 = vmul.f32 %v237, %v237
    %v272 = vmul.f32 %v238, %v238
    %v273 = vmul.f32 %v239, %v239
    %v274 = vmul.f32 %v240, %v240
    %v275 = vadd.f32 %v267, %v268
    %276 = vadd.xlane.f32.xlu0 %v275
    %v277 = vpop.xlane.xlu0 %276
    %v278 = vadd.f32 %v269, %v270
    %279 = vadd.xlane.f32.xlu0 %v278
    %v280 = vpop.xlane.xlu0 %279
    %v281 = vadd.f32 %v271, %v272
    %282 = vadd.xlane.f32.xlu0 %v281
    %v283 = vpop.xlane.xlu0 %282
    %v284 = vadd.f32 %v273, %v274
    %285 = vadd.xlane.f32.xlu0 %v284
    %v286 = vpop.xlane.xlu0 %285
    %v287 = vadd.f32 %v277, %v280
    %v288 = vrot.slane %v287, 4
    %v289 = vadd.f32 %v287, %v288
    %v290 = vrot.slane %v289, 2
    %v291 = vadd.f32 %v289, %v290
    %v292 = vrot.slane %v291, 1
    %v293 = vadd.f32 %v291, %v292
    %v294 = vadd.f32 %v283, %v286
    %v295 = vrot.slane %v294, 4
    %v296 = vadd.f32 %v294, %v295
    %v297 = vrot.slane %v296, 2
    %v298 = vadd.f32 %v296, %v297
    %v299 = vrot.slane %v298, 1
    %v300 = vadd.f32 %v298, %v299
    %v301 = vmul.f32 %v259, 0.00024414063
    %v302 = vmul.f32 %v266, 0.00024414063
    %v303 = vmul.f32 %v293, 0.00024414063
    %v304 = vmul.f32 %v300, 0.00024414063
    %v305 = vmul.f32 %v301, %v301
    %v306 = vmul.f32 %v302, %v302
    %v307 = vsub.f32 %v303, %v305
    %v308 = vsub.f32 %v304, %v306
    %v309 = vadd.f32 %v307, 1e-08
    %v310 = vadd.f32 %v308, 1e-08
    %v311 = vrsqrt.pop %v309
    %v312 = vrsqrt.pop %v310
    %v313 = vmul.f32 %v311, %v79
    %v314 = vmul.f32 %v312, %v79
    %v315 = vmul.f32 %v301, %v313
    %v316 = vmul.f32 %v302, %v314
    %v317 = vsub.f32 %v81, %v315
    %v318 = vsub.f32 %v81, %v316
    %v321 = vlaneseq
    %v322 = vshrl.u32 %v321, 7
    %v323 = vsub.s32 0, %v322
    %v324 = vrot.slane %v313, %v323
    %v325 = vlaneseq
    %v326 = vshrl.u32 %v325, 7
    %v327 = vsub.s32 1, %v326
    %v328 = vrot.slane %v313, %v327
    %v329 = vlaneseq
    %v330 = vshrl.u32 %v329, 7
    %v331 = vsub.s32 0, %v330
    %v332 = vrot.slane %v314, %v331
    %v333 = vlaneseq
    %v334 = vshrl.u32 %v333, 7
    %v335 = vsub.s32 1, %v334
    %v336 = vrot.slane %v314, %v335
    %v341 = vmul.f32 %v233, %v324
    %v342 = vmul.f32 %v234, %v328
    %v343 = vmul.f32 %v235, %v324
    %v344 = vmul.f32 %v236, %v328
    %v345 = vmul.f32 %v237, %v332
    %v346 = vmul.f32 %v238, %v336
    %v347 = vmul.f32 %v239, %v332
    %v348 = vmul.f32 %v240, %v336
    %v351 = vlaneseq
    %v352 = vshrl.u32 %v351, 7
    %v353 = vsub.s32 0, %v352
    %v354 = vrot.slane %v317, %v353
    %v355 = vlaneseq
    %v356 = vshrl.u32 %v355, 7
    %v357 = vsub.s32 1, %v356
    %v358 = vrot.slane %v317, %v357
    %v359 = vlaneseq
    %v360 = vshrl.u32 %v359, 7
    %v361 = vsub.s32 0, %v360
    %v362 = vrot.slane %v318, %v361
    %v363 = vlaneseq
    %v364 = vshrl.u32 %v363, 7
    %v365 = vsub.s32 1, %v364
    %v366 = vrot.slane %v318, %v365
    %v371 = vadd.f32 %v341, %v354
    %v372 = vadd.f32 %v342, %v358
    %v373 = vadd.f32 %v343, %v354
    %v374 = vadd.f32 %v344, %v358
    %v375 = vadd.f32 %v345, %v362
    %v376 = vadd.f32 %v346, %v366
    %v377 = vadd.f32 %v347, %v362
    %v378 = vadd.f32 %v348, %v366
    %v379 = vld [vmem:[%s2] ss:$4 sm:$0x3]
    %v380 = vrot.slane %v371, 7
    %v381 = vrot.slane %v372, 7
    %v382 = vrot.slane %v373, 7
    %v383 = vrot.slane %v374, 7
    %v384 = vrot.slane %v375, 7
    %v385 = vrot.slane %v376, 7
    %v386 = vrot.slane %v377, 7
    %v387 = vrot.slane %v378, 7
    %v388 = vlaneseq
    %v389 = vshrl.u32 %v388, 7
    %vm390 = vcmp.lt.s32.totalorder %v389, 1
    %v391 = vsel %vm390, %v384, %v386
    %v392 = vsel %vm390, %v385, %v387
    %v393 = vsel %vm390, %v382, %v384
    %v394 = vsel %vm390, %v383, %v385
    %v395 = vsel %vm390, %v380, %v382
    %v396 = vsel %vm390, %v381, %v383
    %v397 = vsel %vm390, %v386, %v380
    %v398 = vsel %vm390, %v387, %v381
    %v400 = vlaneseq
    %v401 = vshrl.u32 %v400, 7
    %v402 = vsub.s32 0, %v401
    %v403 = vrot.slane %v379, %v402
    %v404 = vlaneseq
    %v405 = vshrl.u32 %v404, 7
    %v406 = vsub.s32 1, %v405
    %v407 = vrot.slane %v379, %v406
    %v410 = vmul.f32 %v403, %v397
    %v411 = vmul.f32 %v407, %v398
    %v412 = vmul.f32 %v403, %v395
    %v413 = vmul.f32 %v407, %v396
    %v414 = vmul.f32 %v403, %v393
    %v415 = vmul.f32 %v407, %v394
    %v416 = vmul.f32 %v403, %v391
    %v417 = vmul.f32 %v407, %v392
    %v418 = vld [vmem:[%s3] sm:$0xff]
    %v419 = vld [vmem:[%s3 + $0x8] sm:$0xff]
    %v420 = vld [vmem:[%s3 + $0x10] sm:$0xff]
    %v421 = vld [vmem:[%s3 + $0x18] sm:$0xff]
    %423 = vset.pattern.permute.xlu0 0
    %424 = vperm.xlu0 %423, %v418
    %v425 = vpop.permute.xlu0 %424
    %428 = vset.pattern.permute.xlu0 0
    %429 = vperm.xlu0 %428, %v419
    %v430 = vpop.permute.xlu0 %429
    %433 = vset.pattern.permute.xlu0 0
    %434 = vperm.xlu0 %433, %v420
    %v435 = vpop.permute.xlu0 %434
    %438 = vset.pattern.permute.xlu0 0
    %439 = vperm.xlu0 %438, %v421
    %v440 = vpop.permute.xlu0 %439
    %v442 = vmul.f32 %v410, %v425
    %v443 = vmul.f32 %v411, %v425
    %v444 = vmul.f32 %v412, %v430
    %v445 = vmul.f32 %v413, %v430
    %v446 = vmul.f32 %v414, %v435
    %v447 = vmul.f32 %v415, %v435
    %v448 = vmul.f32 %v416, %v440
    %v449 = vmul.f32 %v417, %v440
    %s450 = scalar_lea.vmem %s2, 1
    %v451 = vld [vmem:[%s450] ss:$4 sm:$0x3]
    %v453 = vlaneseq
    %v454 = vshrl.u32 %v453, 7
    %v455 = vsub.s32 0, %v454
    %v456 = vrot.slane %v451, %v455
    %v457 = vlaneseq
    %v458 = vshrl.u32 %v457, 7
    %v459 = vsub.s32 1, %v458
    %v460 = vrot.slane %v451, %v459
    %v463 = vmul.f32 %v456, %v371
    %v464 = vmul.f32 %v460, %v372
    %v465 = vmul.f32 %v456, %v373
    %v466 = vmul.f32 %v460, %v374
    %v467 = vmul.f32 %v456, %v375
    %v468 = vmul.f32 %v460, %v376
    %v469 = vmul.f32 %v456, %v377
    %v470 = vmul.f32 %v460, %v378
    %v471 = vadd.f32 %v442, %v463
    %v472 = vadd.f32 %v443, %v464
    %v473 = vadd.f32 %v444, %v465
    %v474 = vadd.f32 %v445, %v466
    %v475 = vadd.f32 %v446, %v467
    %v476 = vadd.f32 %v447, %v468
    %v477 = vadd.f32 %v448, %v469
    %v478 = vadd.f32 %v449, %v470
    %s479 = scalar_lea.vmem %s2, 2
    %v480 = vld [vmem:[%s479] ss:$4 sm:$0x3]
    %v481 = vrot.slane %v371, 1
    %v482 = vrot.slane %v372, 1
    %v483 = vrot.slane %v373, 1
    %v484 = vrot.slane %v374, 1
    %v485 = vrot.slane %v375, 1
    %v486 = vrot.slane %v376, 1
    %v487 = vrot.slane %v377, 1
    %v488 = vrot.slane %v378, 1
    %vm489 = vcmp.lt.s32.totalorder %v389, 7
    %v490 = vsel %vm489, %v485, %v487
    %v491 = vsel %vm489, %v486, %v488
    %v492 = vsel %vm489, %v483, %v485
    %v493 = vsel %vm489, %v484, %v486
    %v494 = vsel %vm489, %v481, %v483
    %v495 = vsel %vm489, %v482, %v484
    %v496 = vsel %vm489, %v487, %v481
    %v497 = vsel %vm489, %v488, %v482
    %v499 = vlaneseq
    %v500 = vshrl.u32 %v499, 7
    %v501 = vsub.s32 0, %v500
    %v502 = vrot.slane %v480, %v501
    %v503 = vlaneseq
    %v504 = vshrl.u32 %v503, 7
    %v505 = vsub.s32 1, %v504
    %v506 = vrot.slane %v480, %v505
    %v509 = vmul.f32 %v502, %v494
    %v510 = vmul.f32 %v506, %v495
    %v511 = vmul.f32 %v502, %v492
    %v512 = vmul.f32 %v506, %v493
    %v513 = vmul.f32 %v502, %v490
    %v514 = vmul.f32 %v506, %v491
    %v515 = vmul.f32 %v502, %v496
    %v516 = vmul.f32 %v506, %v497
    %517 = vset.pattern.permute.xlu0 2
    %518 = vperm.xlu0 %517, %v418
    %v519 = vpop.permute.xlu0 %518
    %521 = vset.pattern.permute.xlu0 2
    %522 = vperm.xlu0 %521, %v419
    %v523 = vpop.permute.xlu0 %522
    %525 = vset.pattern.permute.xlu0 2
    %526 = vperm.xlu0 %525, %v420
    %v527 = vpop.permute.xlu0 %526
    %529 = vset.pattern.permute.xlu0 2
    %530 = vperm.xlu0 %529, %v421
    %v531 = vpop.permute.xlu0 %530
    %v533 = vmul.f32 %v509, %v519
    %v534 = vmul.f32 %v510, %v519
    %v535 = vmul.f32 %v511, %v523
    %v536 = vmul.f32 %v512, %v523
    %v537 = vmul.f32 %v513, %v527
    %v538 = vmul.f32 %v514, %v527
    %v539 = vmul.f32 %v515, %v531
    %v540 = vmul.f32 %v516, %v531
    %v541 = vadd.f32 %v471, %v533
    %v542 = vadd.f32 %v472, %v534
    %v543 = vadd.f32 %v473, %v535
    %v544 = vadd.f32 %v474, %v536
    %v545 = vadd.f32 %v475, %v537
    %v546 = vadd.f32 %v476, %v538
    %v547 = vadd.f32 %v477, %v539
    %v548 = vadd.f32 %v478, %v540
    %v550 = vlaneseq
    %v551 = vshrl.u32 %v550, 7
    %v552 = vsub.s32 0, %v551
    %v553 = vrot.slane %v83, %v552
    %v554 = vlaneseq
    %v555 = vshrl.u32 %v554, 7
    %v556 = vsub.s32 1, %v555
    %v557 = vrot.slane %v83, %v556
    %v560 = vadd.f32 %v541, %v553
    %v561 = vadd.f32 %v542, %v557
    %v562 = vadd.f32 %v543, %v553
    %v563 = vadd.f32 %v544, %v557
    %v564 = vadd.f32 %v545, %v553
    %v565 = vadd.f32 %v546, %v557
    %v566 = vadd.f32 %v547, %v553
    %v567 = vadd.f32 %v548, %v557
    %vm568 = vcmp.gt.f32.partialorder %v560, 0.0
    %vm569 = vcmp.gt.f32.partialorder %v561, 0.0
    %vm570 = vcmp.gt.f32.partialorder %v562, 0.0
    %vm571 = vcmp.gt.f32.partialorder %v563, 0.0
    %vm572 = vcmp.gt.f32.partialorder %v564, 0.0
    %vm573 = vcmp.gt.f32.partialorder %v565, 0.0
    %vm574 = vcmp.gt.f32.partialorder %v566, 0.0
    %vm575 = vcmp.gt.f32.partialorder %v567, 0.0
    %v576 = vstv %s76
    %v577 = vmul.f32 %v576, %v560
    %v578 = vmul.f32 %v576, %v561
    %v579 = vmul.f32 %v576, %v562
    %v580 = vmul.f32 %v576, %v563
    %v581 = vmul.f32 %v576, %v564
    %v582 = vmul.f32 %v576, %v565
    %v583 = vmul.f32 %v576, %v566
    %v584 = vmul.f32 %v576, %v567
    %v585 = vsel %vm568, %v560, %v577
    %v586 = vsel %vm569, %v561, %v578
    %v587 = vsel %vm570, %v562, %v579
    %v588 = vsel %vm571, %v563, %v580
    %v589 = vsel %vm572, %v564, %v581
    %v590 = vsel %vm573, %v565, %v582
    %v591 = vsel %vm574, %v566, %v583
    %v592 = vsel %vm575, %v567, %v584
    %v593 = vadd.f32 %v585, %v586
    %594 = vadd.xlane.f32.xlu0 %v593
    %v595 = vpop.xlane.xlu0 %594
    %v596 = vadd.f32 %v587, %v588
    %597 = vadd.xlane.f32.xlu0 %v596
    %v598 = vpop.xlane.xlu0 %597
    %v599 = vadd.f32 %v589, %v590
    %600 = vadd.xlane.f32.xlu0 %v599
    %v601 = vpop.xlane.xlu0 %600
    %v602 = vadd.f32 %v591, %v592
    %603 = vadd.xlane.f32.xlu0 %v602
    %v604 = vpop.xlane.xlu0 %603
    %v605 = vadd.f32 %v595, %v598
    %v606 = vrot.slane %v605, 4
    %v607 = vadd.f32 %v605, %v606
    %v608 = vrot.slane %v607, 2
    %v609 = vadd.f32 %v607, %v608
    %v610 = vrot.slane %v609, 1
    %v611 = vadd.f32 %v609, %v610
    %v612 = vadd.f32 %v601, %v604
    %v613 = vrot.slane %v612, 4
    %v614 = vadd.f32 %v612, %v613
    %v615 = vrot.slane %v614, 2
    %v616 = vadd.f32 %v614, %v615
    %v617 = vrot.slane %v616, 1
    %v618 = vadd.f32 %v616, %v617
    %v619 = vmul.f32 %v585, %v585
    %v620 = vmul.f32 %v586, %v586
    %v621 = vmul.f32 %v587, %v587
    %v622 = vmul.f32 %v588, %v588
    %v623 = vmul.f32 %v589, %v589
    %v624 = vmul.f32 %v590, %v590
    %v625 = vmul.f32 %v591, %v591
    %v626 = vmul.f32 %v592, %v592
    %v627 = vadd.f32 %v619, %v620
    %628 = vadd.xlane.f32.xlu0 %v627
    %v629 = vpop.xlane.xlu0 %628
    %v630 = vadd.f32 %v621, %v622
    %631 = vadd.xlane.f32.xlu0 %v630
    %v632 = vpop.xlane.xlu0 %631
    %v633 = vadd.f32 %v623, %v624
    %634 = vadd.xlane.f32.xlu0 %v633
    %v635 = vpop.xlane.xlu0 %634
    %v636 = vadd.f32 %v625, %v626
    %637 = vadd.xlane.f32.xlu0 %v636
    %v638 = vpop.xlane.xlu0 %637
    %v639 = vadd.f32 %v629, %v632
    %v640 = vrot.slane %v639, 4
    %v641 = vadd.f32 %v639, %v640
    %v642 = vrot.slane %v641, 2
    %v643 = vadd.f32 %v641, %v642
    %v644 = vrot.slane %v643, 1
    %v645 = vadd.f32 %v643, %v644
    %v646 = vadd.f32 %v635, %v638
    %v647 = vrot.slane %v646, 4
    %v648 = vadd.f32 %v646, %v647
    %v649 = vrot.slane %v648, 2
    %v650 = vadd.f32 %v648, %v649
    %v651 = vrot.slane %v650, 1
    %v652 = vadd.f32 %v650, %v651
    %v653 = vmul.f32 %v611, 0.00024414063
    %v654 = vmul.f32 %v618, 0.00024414063
    %v655 = vmul.f32 %v645, 0.00024414063
    %v656 = vmul.f32 %v652, 0.00024414063
    %v657 = vmul.f32 %v653, %v653
    %v658 = vmul.f32 %v654, %v654
    %v659 = vsub.f32 %v655, %v657
    %v660 = vsub.f32 %v656, %v658
    %v661 = vadd.f32 %v659, 1e-08
    %v662 = vadd.f32 %v660, 1e-08
    %v663 = vrsqrt.pop %v661
    %v664 = vrsqrt.pop %v662
    %v665 = vld [vmem:[#allocation6] sm:$0xff]
    %v666 = vld [vmem:[#allocation6 + $0x8] sm:$0xff]
    %v667 = vld [vmem:[#allocation6 + $0x10] sm:$0xff]
    %v668 = vld [vmem:[#allocation6 + $0x18] sm:$0xff]
    %v669 = vld [vmem:[#allocation6 + $0x20] sm:$0xff]
    %v670 = vld [vmem:[#allocation6 + $0x28] sm:$0xff]
    %v671 = vld [vmem:[#allocation6 + $0x30] sm:$0xff]
    %v672 = vld [vmem:[#allocation6 + $0x38] sm:$0xff]
    %v673 = vld [vmem:[#allocation6 + $0x40] sm:$0xff]
    %v674 = vld [vmem:[#allocation6 + $0x48] sm:$0xff]
    %v675 = vld [vmem:[#allocation6 + $0x50] sm:$0xff]
    %v676 = vld [vmem:[#allocation6 + $0x58] sm:$0xff]
    %v677 = vld [vmem:[#allocation6 + $0x60] sm:$0xff]
    %v678 = vld [vmem:[#allocation6 + $0x68] sm:$0xff]
    %v679 = vld [vmem:[#allocation6 + $0x70] sm:$0xff]
    %v680 = vld [vmem:[#allocation6 + $0x78] sm:$0xff]
    %v681 = vld [vmem:[#allocation6 + $0x80] sm:$0xff]
    %v682 = vld [vmem:[#allocation6 + $0x88] sm:$0xff]
    %v683 = vld [vmem:[#allocation6 + $0x90] sm:$0xff]
    %v684 = vld [vmem:[#allocation6 + $0x98] sm:$0xff]
    %v685 = vld [vmem:[#allocation6 + $0xa0] sm:$0xff]
    %v686 = vld [vmem:[#allocation6 + $0xa8] sm:$0xff]
    %v687 = vld [vmem:[#allocation6 + $0xb0] sm:$0xff]
    %v688 = vld [vmem:[#allocation6 + $0xb8] sm:$0xff]
    %v689 = vld [vmem:[#allocation6 + $0xc0] sm:$0xff]
    %v690 = vld [vmem:[#allocation6 + $0xc8] sm:$0xff]
    %v691 = vld [vmem:[#allocation6 + $0xd0] sm:$0xff]
    %v692 = vld [vmem:[#allocation6 + $0xd8] sm:$0xff]
    %v693 = vld [vmem:[#allocation6 + $0xe0] sm:$0xff]
    %v694 = vld [vmem:[#allocation6 + $0xe8] sm:$0xff]
    %v695 = vld [vmem:[#allocation6 + $0xf0] sm:$0xff]
    %v696 = vld [vmem:[#allocation6 + $0xf8] sm:$0xff]
    %697 = vmatprep.subr.mxu0 0.0
    %698 = vmatpush1.msra.mxu0 %v665
    %699 = vmatprep.subr.mxu0 0.0
    %700 = vmatpush1.msra.mxu0 %v666
    %701 = vmatprep.subr.mxu0 0.0
    %702 = vmatpush1.msra.mxu0 %v667
    %703 = vmatprep.subr.mxu0 0.0
    %704 = vmatpush1.msra.mxu0 %v668
    %705 = vmatprep.subr.mxu0 0.0
    %706 = vmatpush1.msra.mxu0 %v669
    %707 = vmatprep.subr.mxu0 0.0
    %708 = vmatpush1.msra.mxu0 %v670
    %709 = vmatprep.subr.mxu0 0.0
    %710 = vmatpush1.msra.mxu0 %v671
    %711 = vmatprep.subr.mxu0 0.0
    %712 = vmatpush1.msra.mxu0 %v672
    %713 = vmatprep.subr.mxu0 0.0
    %714 = vmatpush1.msra.mxu0 %v673
    %715 = vmatprep.subr.mxu0 0.0
    %716 = vmatpush1.msra.mxu0 %v674
    %717 = vmatprep.subr.mxu0 0.0
    %718 = vmatpush1.msra.mxu0 %v675
    %719 = vmatprep.subr.mxu0 0.0
    %720 = vmatpush1.msra.mxu0 %v676
    %721 = vmatprep.subr.mxu0 0.0
    %722 = vmatpush1.msra.mxu0 %v677
    %723 = vmatprep.subr.mxu0 0.0
    %724 = vmatpush1.msra.mxu0 %v678
    %725 = vmatprep.subr.mxu0 0.0
    %726 = vmatpush1.msra.mxu0 %v679
    %727 = vmatprep.subr.mxu0 0.0
    %728 = vmatpush1.msra.mxu0 %v680
    %729 = vmatprep.subr.mxu0 0.0
    %730 = vmatpush1.msra.mxu0 %v681
    %731 = vmatprep.subr.mxu0 0.0
    %732 = vmatpush1.msra.mxu0 %v682
    %733 = vmatprep.subr.mxu0 0.0
    %734 = vmatpush1.msra.mxu0 %v683
    %735 = vmatprep.subr.mxu0 0.0
    %736 = vmatpush1.msra.mxu0 %v684
    %737 = vmatprep.subr.mxu0 0.0
    %738 = vmatpush1.msra.mxu0 %v685
    %739 = vmatprep.subr.mxu0 0.0
    %740 = vmatpush1.msra.mxu0 %v686
    %741 = vmatprep.subr.mxu0 0.0
    %742 = vmatpush1.msra.mxu0 %v687
    %743 = vmatprep.subr.mxu0 0.0
    %744 = vmatpush1.msra.mxu0 %v688
    %745 = vmatprep.subr.mxu0 0.0
    %746 = vmatpush1.msra.mxu0 %v689
    %747 = vmatprep.subr.mxu0 0.0
    %748 = vmatpush1.msra.mxu0 %v690
    %749 = vmatprep.subr.mxu0 0.0
    %750 = vmatpush1.msra.mxu0 %v691
    %751 = vmatprep.subr.mxu0 0.0
    %752 = vmatpush1.msra.mxu0 %v692
    %753 = vmatprep.subr.mxu0 0.0
    %754 = vmatpush1.msra.mxu0 %v693
    %755 = vmatprep.subr.mxu0 0.0
    %756 = vmatpush1.msra.mxu0 %v694
    %757 = vmatprep.subr.mxu0 0.0
    %758 = vmatpush1.msra.mxu0 %v695
    %759 = vmatprep.subr.mxu0 0.0
    %760 = vmatpush1.msra.mxu0 %v696
    %761 = vmatprep.mubr.f32.mxu0 %v586
    %762 = vmatmul.mubr.f32.gmra.mrb[0].mxu0 %v585
    %v763 = vpop.f32.mrb[0].mxu0
    %v764 = vadd.f32 0.0, %v763
    %v765 = vpop.f32.mrb[0].mxu0
    %766 = vmatprep.mubr.f32.mxu0 %v588
    %767 = vmatmul.mubr.f32.gmra.mrb[0].mxu0 %v587
    %v768 = vpop.f32.mrb[0].mxu0
    %v769 = vadd.f32 0.0, %v768
    %v770 = vpop.f32.mrb[0].mxu0
    %771 = vmatprep.mubr.f32.mxu0 %v590
    %772 = vmatmul.mubr.f32.gmra.mrb[0].mxu0 %v589
    %v773 = vpop.f32.mrb[0].mxu0
    %v774 = vadd.f32 0.0, %v773
    %v775 = vpop.f32.mrb[0].mxu0
    %776 = vmatprep.mubr.f32.mxu0 %v592
    %777 = vmatmul.mubr.f32.gmra.mrb[0].mxu0 %v591
    %v778 = vpop.f32.mrb[0].mxu0
    %v779 = vadd.f32 0.0, %v778
    %v780 = vpop.f32.mrb[0].mxu0
    %781 = vdwg.mxu0
    %v782 = vld [vmem:[%s6] sm:$0x1]
    %v783 = vld [vmem:[%s6 + $0x1] sm:$0x1]
    %v784 = vmul.f32 %v653, %v663
    %v785 = vmul.f32 %v654, %v664
    %v786 = vmul.f32 %v784, %v783
    %v787 = vmul.f32 %v785, %v783
    %v788 = vsub.f32 %v782, %v786
    %v789 = vsub.f32 %v782, %v787
    %v790 = vmul.f32 %v764, %v663
    %v791 = vmul.f32 %v769, %v663
    %v792 = vmul.f32 %v774, %v664
    %v793 = vmul.f32 %v779, %v664
    %v794 = vadd.f32 %v71, %v790
    %v795 = vadd.f32 %v72, %v791
    %v796 = vadd.f32 %v73, %v792
    %v797 = vadd.f32 %v74, %v793
    %v798 = vlaneseq
    %v799 = vshrl.u32 %v798, 7
    %v800 = vsub.s32 0, %v799
    %v801 = vrot.slane %v788, %v800
    %v802 = vlaneseq
    %v803 = vshrl.u32 %v802, 7
    %v804 = vsub.s32 0, %v803
    %v805 = vrot.slane %v789, %v804
    %v806 = vadd.f32 %v794, %v801
    %v807 = vadd.f32 %v795, %v801
    %v808 = vadd.f32 %v796, %v805
    %v809 = vadd.f32 %v797, %v805
    %810 = vst [vmem:[#allocation9] sm:$0xff] %v806
    %811 = vst [vmem:[#allocation9 + $0x8] sm:$0xff] %v807
    %812 = vst [vmem:[#allocation9 + $0x10] sm:$0xff] %v808
    %813 = vst [vmem:[#allocation9 + $0x18] sm:$0xff] %v809
    // Predicated region
    $region46: #{tpu_custom_call.1} parent=1 // pred_check
      _
    $region47: #{tpu_custom_call.1} parent=1 // pred_check_branch
      %815 = sbr.rel (0) target = $region49
    $region48: #{tpu_custom_call.1} parent=1 // pred_region
      %s817 = ssub.s32 512, 512
      %818 = vsyncadd [#allocation4], %s817
      %s819 = sshll.u32 [#allocation9], 4
      %s820 = int_to_ptr.vmem [resolvable:$true] %s819
      %825 = dma.vmem_to_hbm [thread:$0]  %s820, 512, %s8, [#allocation4], 128, 128, 8
    $region49: #{tpu_custom_call.1} parent=1 // pred_fallthru
      _
    // Predicated region
    $region50: #{tpu_custom_call.1} parent=1 // pred_check
      _
    $region51: #{tpu_custom_call.1} parent=1 // pred_check_branch
      %827 = sbr.rel (0) target = $region53
    $region52: #{tpu_custom_call.1} parent=1 // pred_region
      %828 = dma.done [#allocation4], 512
    $region53: #{tpu_custom_call.1} parent=1 // pred_fallthru
      _
    %829 = vsyncpa [#allocation3], 1
    %830 = vsyncpa [#allocation7], 1
    %831 = vsyncpa [#allocation4], 1
    %832 = vsyncpa [#allocation5], 1

</llo_original>
